<compile_context>
chip_gen: v6e
topology: v6e:2x2x1
jax: 0.10.0
libtpu: 0.0.40
codegen_flags: <defaults>
</compile_context>

<pallas_src>
import jax
import jax.numpy as jnp
from jax.experimental import pallas as pl
from jax.experimental.pallas import tpu as pltpu


def head_kernel(x_ref, wconv_ref, bconv_ref, woc_ref, boc_ref,
                wlin_ref, blin_ref, out_ref):
    # x_ref     : (Bt, S, Cin)       batch chunk of the input
    # wconv_ref : (K*Cin, E)         ConvBlock conv weight, tap-major flattened
    # bconv_ref : (1, E)             ConvBlock conv bias
    # woc_ref   : (P, S)             out_conv (Conv1d seq->pred, k=1) weight
    # boc_ref   : (P, 1)             out_conv bias
    # wlin_ref  : (E, O)             out_layer Linear weight (transposed)
    # blin_ref  : (1, O)             out_layer Linear bias
    # out_ref   : (1, Bt, P*O)       lane-dense output block
    Bt, S, Cin = x_ref.shape
    KC, E = wconv_ref.shape
    K = KC // Cin
    pad = K // 2
    P = woc_ref.shape[0]
    O = wlin_ref.shape[1]

    x = x_ref[...].astype(jnp.float32)                       # (Bt, S, Cin)

    # 'same' zero padding along the sequence axis, done in VMEM (no HBM pad copy).
    if pad > 0:
        zeros = jnp.zeros((Bt, pad, Cin), jnp.float32)
        xpad = jnp.concatenate([zeros, x, zeros], axis=1)    # (Bt, S + 2*pad, Cin)
    else:
        xpad = x

    # im2col: K shifted windows stacked along the channel (lane) axis.
    if K > 1:
        xcols = jnp.concatenate([xpad[:, k:k + S, :] for k in range(K)], axis=-1)
    else:
        xcols = xpad[:, :S, :]
    xcols2 = xcols.reshape(Bt * S, K * Cin)                  # batch folded into M

    # ConvBlock conv: single fused matmul over all taps, + bias, ReLU (dropout = identity, eval).
    h = jnp.dot(xcols2, wconv_ref[...], preferred_element_type=jnp.float32)
    h = jnp.maximum(h + bconv_ref[...], 0.0)                 # (Bt*S, E)
    h3 = h.reshape(Bt, S, E)

    # out_conv: Conv1d(seq_len -> pred_len, kernel_size=1) == batched (P,S) @ (S,E).
    woc_b = jnp.broadcast_to(woc_ref[...], (Bt, P, S))
    y = jnp.einsum('bps,bse->bpe', woc_b, h3,
                   preferred_element_type=jnp.float32)
    y = y + boc_ref[...][None]                               # (Bt, P, E)

    # out_layer: Linear(emb_len -> emb_out), batched.
    wlin_b = jnp.broadcast_to(wlin_ref[...], (Bt, E, O))
    z = jnp.einsum('bpe,beo->bpo', y, wlin_b,
                   preferred_element_type=jnp.float32)
    z = z + blin_ref[...][None]                              # (Bt, P, O)

    # Lane-dense store: flatten (P, O) into the last (lane) dim.
    out_ref[0] = z.reshape(Bt, P * O).astype(out_ref.dtype)


def _choose_batch_tile(B, S, Cin, K, E, P, O, vmem_budget_bytes=8 << 20):
    """Pick a batch chunk Bt that divides B, fits a VMEM budget, and keeps >=2 grid steps."""
    per_b = 4 * (2 * S * Cin            # double-buffered input block
                 + S * K * Cin          # im2col columns
                 + S * E                # conv activations
                 + P * E + P * O)       # out_conv / out_layer results
    cap = max(1, vmem_budget_bytes // max(per_b, 1))
    if B >= 2:
        cap = min(cap, B // 2)          # keep >= 2 grid steps (v7x has 2 TensorCores)
    cap = max(1, min(cap, B))
    bt = 1
    for d in range(1, cap + 1):         # largest divisor of B not exceeding cap
        if B % d == 0:
            bt = d
    return bt


def head_forward(x, params, kernel_size=3):
    """x: (B, seq_len, emb_in) -> (B, pred_len, emb_out)."""
    wconv, bconv, woc, boc, wlin, blin = params
    B, S, Cin = x.shape
    K = kernel_size
    E = wconv.shape[2]
    P = woc.shape[0]
    O = wlin.shape[1]

    wconv_flat = wconv.reshape(K * Cin, E)                   # tap-major flatten (matches im2col)

    Bt = _choose_batch_tile(B, S, Cin, K, E, P, O)
    nb = B // Bt

    cost = pl.CostEstimate(
        flops=2 * B * S * K * Cin * E + 2 * B * P * S * E + 2 * B * P * E * O,
        transcendentals=0,
        bytes_accessed=4 * (B * S * Cin + K * Cin * E + E + P * S + P + E * O + O
                            + B * P * O),
    )

    out2 = pl.pallas_call(
        head_kernel,
        out_shape=jax.ShapeDtypeStruct((nb, Bt, P * O), x.dtype),
        grid=(nb,),
        in_specs=[
            pl.BlockSpec((Bt, S, Cin),  lambda b: (b, 0, 0)),
            pl.BlockSpec((K * Cin, E),  lambda b: (0, 0)),   # constant maps -> no per-step re-DMA
            pl.BlockSpec((1, E),        lambda b: (0, 0)),
            pl.BlockSpec((P, S),        lambda b: (0, 0)),
            pl.BlockSpec((P, 1),        lambda b: (0, 0)),
            pl.BlockSpec((E, O),        lambda b: (0, 0)),
            pl.BlockSpec((1, O),        lambda b: (0, 0)),
        ],
        out_specs=pl.BlockSpec((1, Bt, P * O), lambda b: (b, 0, 0)),
        compiler_params=pltpu.CompilerParams(
            dimension_semantics=("parallel",),
            vmem_limit_bytes=32 * 1024 * 1024),
        cost_estimate=cost,
    )(x, wconv_flat, bconv, woc, boc, wlin, blin)

    return out2.reshape(B, P, O)


def ref_forward(x, params, kernel_size=3):
    """Pure-JAX reference of the same forward pass."""
    wconv, bconv, woc, boc, wlin, blin = params
    B, S, Cin = x.shape
    K = kernel_size
    pad = K // 2
    xpad = jnp.pad(x, ((0, 0), (pad, pad), (0, 0)))
    h = sum(jnp.einsum('bsc,ce->bse', xpad[:, k:k + S, :], wconv[k])
            for k in range(K)) + bconv                        # (B, S, E)
    h = jnp.maximum(h, 0.0)
    y = jnp.einsum('ps,bse->bpe', woc, h) + boc.reshape(1, -1, 1)   # (B, P, E)
    z = jnp.einsum('bpe,eo->bpo', y, wlin) + blin                   # (B, P, O)
    return z


if __name__ == "__main__":
    # Shapes implied by Head(basic_block='cnn') defaults (emb_len=seq_len=pred_len=8, emb_out=1, K=3).
    B, seq_len, emb_in = 8, 8, 4
    emb_len, pred_len, emb_out, kernel_size = 8, 8, 1, 3

    key = jax.random.PRNGKey(0)
    k_x, k_wc, k_bc, k_woc, k_boc, k_wl, k_bl = jax.random.split(key, 7)

    x = jax.random.normal(k_x, (B, seq_len, emb_in), jnp.float32)

    # Deterministic synthetic parameters (PyTorch shapes noted; stored in kernel layout).
    wconv = 0.2 * jax.random.normal(k_wc, (kernel_size, emb_in, emb_len), jnp.float32)  # Conv1d (E,Cin,K) -> (K,Cin,E)
    bconv = 0.1 * jax.random.normal(k_bc, (1, emb_len), jnp.float32)                    # (E,)
    woc   = 0.2 * jax.random.normal(k_woc, (pred_len, seq_len), jnp.float32)            # Conv1d (P,S,1) -> (P,S)
    boc   = 0.1 * jax.random.normal(k_boc, (pred_len, 1), jnp.float32)                  # (P,)
    wlin  = 0.2 * jax.random.normal(k_wl, (emb_len, emb_out), jnp.float32)              # Linear (O,E) -> (E,O)
    blin  = 0.1 * jax.random.normal(k_bl, (1, emb_out), jnp.float32)                    # (O,)
    params = (wconv, bconv, woc, boc, wlin, blin)

    out = head_forward(x, params, kernel_size)
    out = jax.block_until_ready(out)

    ref = ref_forward(x, params, kernel_size)
    assert out.shape == (B, pred_len, emb_out)
    assert jnp.allclose(out, ref, atol=1e-5, rtol=1e-5), "Pallas output mismatch vs reference"

    print("KERNEL_OK")
</pallas_src>

<mosaic_0001>
module attributes {stable_mosaic.version = 11 : i64} {
  func.func @head_kernel(%arg0: i32, %arg1: memref<4x8x4xf32, #tpu.memory_space<vmem>>, %arg2: memref<12x8xf32, #tpu.memory_space<vmem>>, %arg3: memref<1x8xf32, #tpu.memory_space<vmem>>, %arg4: memref<8x8xf32, #tpu.memory_space<vmem>>, %arg5: memref<8x1xf32, #tpu.memory_space<vmem>>, %arg6: memref<8x1xf32, #tpu.memory_space<vmem>>, %arg7: memref<1x1xf32, #tpu.memory_space<vmem>>, %arg8: memref<1x4x8xf32, #tpu.memory_space<vmem>>) attributes {dimension_semantics = [#tpu.dimension_semantics<parallel>], iteration_bounds = array<i64: 2>, scalar_prefetch = 0 : i64, scratch_operands = 0 : i64, tpu.core_type = #tpu.core_type<tc>, window_params = [{transform_indices = @transform_0, window_bounds = array<i64: 4, 8, 4>}, {pipeline_mode = #tpu.pipeline_mode<synchronous>, transform_indices = @transform_1, window_bounds = array<i64: 12, 8>}, {pipeline_mode = #tpu.pipeline_mode<synchronous>, transform_indices = @transform_2, window_bounds = array<i64: 1, 8>}, {pipeline_mode = #tpu.pipeline_mode<synchronous>, transform_indices = @transform_3, window_bounds = array<i64: 8, 8>}, {pipeline_mode = #tpu.pipeline_mode<synchronous>, transform_indices = @transform_4, window_bounds = array<i64: 8, 1>}, {pipeline_mode = #tpu.pipeline_mode<synchronous>, transform_indices = @transform_5, window_bounds = array<i64: 8, 1>}, {pipeline_mode = #tpu.pipeline_mode<synchronous>, transform_indices = @transform_6, window_bounds = array<i64: 1, 1>}, {transform_indices = @transform_7, window_bounds = array<i64: 1, 4, 8>}]} {
    %c0 = arith.constant 0 : index
    %c0_0 = arith.constant 0 : index
    %c0_1 = arith.constant 0 : index
    %0 = vector.load %arg1[%c0, %c0_0, %c0_1] : memref<4x8x4xf32, #tpu.memory_space<vmem>>, vector<4x8x4xf32>
    %cst = arith.constant 0.000000e+00 : f32
    %1 = vector.broadcast %cst : f32 to vector<4x1x4xf32>
    %2 = tpu.concatenate %1, %0, %1 in 1 : vector<4x1x4xf32>, vector<4x8x4xf32>, vector<4x1x4xf32> -> vector<4x10x4xf32>
    %3 = vector.extract_strided_slice %2 {offsets = [0, 0, 0], sizes = [4, 8, 4], strides = [1, 1, 1]} : vector<4x10x4xf32> to vector<4x8x4xf32>
    %4 = vector.extract_strided_slice %2 {offsets = [0, 1, 0], sizes = [4, 8, 4], strides = [1, 1, 1]} : vector<4x10x4xf32> to vector<4x8x4xf32>
    %5 = vector.extract_strided_slice %2 {offsets = [0, 2, 0], sizes = [4, 8, 4], strides = [1, 1, 1]} : vector<4x10x4xf32> to vector<4x8x4xf32>
    %6 = tpu.concatenate %3, %4, %5 in 2 : vector<4x8x4xf32>, vector<4x8x4xf32>, vector<4x8x4xf32> -> vector<4x8x12xf32>
    %7 = vector.shape_cast %6 : vector<4x8x12xf32> to vector<32x12xf32>
    %c0_2 = arith.constant 0 : index
    %c0_3 = arith.constant 0 : index
    %8 = vector.load %arg2[%c0_2, %c0_3] : memref<12x8xf32, #tpu.memory_space<vmem>>, vector<12x8xf32>
    %cst_4 = arith.constant dense<0.000000e+00> : vector<32x8xf32>
    %9 = tpu.matmul %7, %8, %cst_4 {dimension_numbers = #tpu.dot_dimension_numbers<[1], [0], [0], [1], [0, 0, 1, 1], [], []>} : vector<32x12xf32>, vector<12x8xf32>, vector<32x8xf32> -> vector<32x8xf32>
    %c0_5 = arith.constant 0 : index
    %c0_6 = arith.constant 0 : index
    %10 = vector.load %arg3[%c0_5, %c0_6] : memref<1x8xf32, #tpu.memory_space<vmem>>, vector<1x8xf32>
    %11 = vector.broadcast %10 : vector<1x8xf32> to vector<32x8xf32>
    %12 = arith.addf %9, %11 : vector<32x8xf32>
    %cst_7 = arith.constant 0.000000e+00 : f32
    %13 = vector.broadcast %cst_7 : f32 to vector<32x8xf32>
    %14 = arith.maximumf %12, %13 : vector<32x8xf32>
    %15 = vector.shape_cast %14 : vector<32x8xf32> to vector<4x8x8xf32>
    %c0_8 = arith.constant 0 : index
    %c0_9 = arith.constant 0 : index
    %16 = vector.load %arg4[%c0_8, %c0_9] : memref<8x8xf32, #tpu.memory_space<vmem>>, vector<8x8xf32>
    %17 = vector.shape_cast %16 : vector<8x8xf32> to vector<1x8x8xf32>
    %18 = vector.broadcast %17 : vector<1x8x8xf32> to vector<4x8x8xf32>
    "tpu.trace_start"() <{level = 10 : i32, message = "bps,bse->bpe"}> : () -> ()
    %cst_10 = arith.constant dense<0.000000e+00> : vector<4x8x8xf32>
    %19 = tpu.matmul %18, %15, %cst_10 {dimension_numbers = #tpu.dot_dimension_numbers<[2], [1], [1], [2], [0, 0, 0, 1, 1, 2], [0], [0]>} : vector<4x8x8xf32>, vector<4x8x8xf32>, vector<4x8x8xf32> -> vector<4x8x8xf32>
    "tpu.trace_stop"() : () -> ()
    %c0_11 = arith.constant 0 : index
    %c0_12 = arith.constant 0 : index
    %20 = vector.load %arg5[%c0_11, %c0_12] : memref<8x1xf32, #tpu.memory_space<vmem>>, vector<8x1xf32>
    %21 = vector.shape_cast %20 : vector<8x1xf32> to vector<1x8x1xf32>
    %22 = vector.broadcast %21 : vector<1x8x1xf32> to vector<4x8x8xf32>
    %23 = arith.addf %19, %22 : vector<4x8x8xf32>
    %c0_13 = arith.constant 0 : index
    %c0_14 = arith.constant 0 : index
    %24 = vector.load %arg6[%c0_13, %c0_14] : memref<8x1xf32, #tpu.memory_space<vmem>>, vector<8x1xf32>
    %25 = vector.shape_cast %24 : vector<8x1xf32> to vector<1x8x1xf32>
    %26 = vector.broadcast %25 : vector<1x8x1xf32> to vector<4x8x1xf32>
    "tpu.trace_start"() <{level = 10 : i32, message = "bpe,beo->bpo"}> : () -> ()
    %cst_15 = arith.constant dense<0.000000e+00> : vector<4x8x1xf32>
    %27 = tpu.matmul %23, %26, %cst_15 {dimension_numbers = #tpu.dot_dimension_numbers<[2], [1], [1], [2], [0, 0, 0, 1, 1, 2], [0], [0]>} : vector<4x8x8xf32>, vector<4x8x1xf32>, vector<4x8x1xf32> -> vector<4x8x1xf32>
    "tpu.trace_stop"() : () -> ()
    %c0_16 = arith.constant 0 : index
    %c0_17 = arith.constant 0 : index
    %28 = vector.load %arg7[%c0_16, %c0_17] : memref<1x1xf32, #tpu.memory_space<vmem>>, vector<1x1xf32>
    %29 = vector.shape_cast %28 : vector<1x1xf32> to vector<1x1x1xf32>
    %30 = vector.broadcast %29 : vector<1x1x1xf32> to vector<4x8x1xf32>
    %31 = arith.addf %27, %30 : vector<4x8x1xf32>
    %32 = vector.shape_cast %31 : vector<4x8x1xf32> to vector<4x8xf32>
    %c0_18 = arith.constant 0 : index
    %c0_19 = arith.constant 0 : index
    %c0_20 = arith.constant 0 : index
    %33 = vector.load %arg8[%c0_18, %c0_19, %c0_20] : memref<1x4x8xf32, #tpu.memory_space<vmem>>, vector<1x4x8xf32>
    %34 = vector.shape_cast %33 : vector<1x4x8xf32> to vector<4x8xf32>
    %35 = vector.shape_cast %32 : vector<4x8xf32> to vector<1x4x8xf32>
    tpu.vector_store %arg8[%c0_18, %c0_19, %c0_20], %35 {strides = array<i32>} : memref<1x4x8xf32, #tpu.memory_space<vmem>>, vector<1x4x8xf32>,
    return
  }
  func.func @transform_0(%arg0: i32) -> (i32, i32, i32) {
    %c0_i32 = arith.constant 0 : i32
    %c0_i32_0 = arith.constant 0 : i32
    %c0_i32_1 = arith.constant 0 : i32
    return %arg0, %c0_i32, %c0_i32_0 : i32, i32, i32
  }
  func.func @transform_1(%arg0: i32) -> (i32, i32) {
    %c0_i32 = arith.constant 0 : i32
    %c0_i32_0 = arith.constant 0 : i32
    %c0_i32_1 = arith.constant 0 : i32
    return %c0_i32, %c0_i32_0 : i32, i32
  }
  func.func @transform_2(%arg0: i32) -> (i32, i32) {
    %c0_i32 = arith.constant 0 : i32
    %c0_i32_0 = arith.constant 0 : i32
    %c0_i32_1 = arith.constant 0 : i32
    return %c0_i32, %c0_i32_0 : i32, i32
  }
  func.func @transform_3(%arg0: i32) -> (i32, i32) {
    %c0_i32 = arith.constant 0 : i32
    %c0_i32_0 = arith.constant 0 : i32
    %c0_i32_1 = arith.constant 0 : i32
    return %c0_i32, %c0_i32_0 : i32, i32
  }
  func.func @transform_4(%arg0: i32) -> (i32, i32) {
    %c0_i32 = arith.constant 0 : i32
    %c0_i32_0 = arith.constant 0 : i32
    %c0_i32_1 = arith.constant 0 : i32
    return %c0_i32, %c0_i32_0 : i32, i32
  }
  func.func @transform_5(%arg0: i32) -> (i32, i32) {
    %c0_i32 = arith.constant 0 : i32
    %c0_i32_0 = arith.constant 0 : i32
    %c0_i32_1 = arith.constant 0 : i32
    return %c0_i32, %c0_i32_0 : i32, i32
  }
  func.func @transform_6(%arg0: i32) -> (i32, i32) {
    %c0_i32 = arith.constant 0 : i32
    %c0_i32_0 = arith.constant 0 : i32
    %c0_i32_1 = arith.constant 0 : i32
    return %c0_i32, %c0_i32_0 : i32, i32
  }
  func.func @transform_7(%arg0: i32) -> (i32, i32, i32) {
    %c0_i32 = arith.constant 0 : i32
    %c0_i32_0 = arith.constant 0 : i32
    %c0_i32_1 = arith.constant 0 : i32
    return %arg0, %c0_i32, %c0_i32_0 : i32, i32, i32
  }
}

</mosaic_0001>

<llo_original>
// kernel: tpu_custom_call.1
$region0: #{tpu_custom_call.1}
  #allocation0 [shape = 'u32[]', space=smem, size = 0x4, offset = 0x4, fixed_abs, tag = 'smem constant byte address 0x4 - core index']
  #allocation1 [shape = 'u32[144,128]{1,0:T(1,128)}', space=vmem, size = 0x12000, scoped, tag = 'internal scratch']
  #allocation2 [shape = 'f32[1,1]{1,0:T(1,128)S(1)}', space=vmem, size = 0x200, scoped, tag = 'scoped memory for tpu_custom_call.1']
  %s0 = inlined_call_operand.vmem [shape: f32[8,8,4], index: 0, kind: input, shape index: {}]
  %s1 = inlined_call_operand.vmem [shape: f32[12,8], index: 1, kind: input, shape index: {}]
  %s2 = inlined_call_operand.vmem [shape: f32[1,8], index: 2, kind: input, shape index: {}]
  %s3 = inlined_call_operand.vmem [shape: f32[8,8], index: 3, kind: input, shape index: {}]
  %s4 = inlined_call_operand.vmem [shape: f32[8,1], index: 4, kind: input, shape index: {}]
  %s5 = inlined_call_operand.vmem [shape: f32[8,1], index: 5, kind: input, shape index: {}]
  %s6 = inlined_call_operand.<no memory space> [shape: f32[1,1], index: 6, kind: input, shape index: {}]
  %s7 = inlined_call_operand.hbm [shape: f32[2,4,8], index: 7, kind: output, shape index: {}]
  %s8 = sld [smem:[#allocation0]]
  $region61: #{tpu_custom_call.1} parent=0
    _
  %s10 = ssub.s32 1, %s8
  %s11 = scalar_select 0, %s10, %s8
  %v12 = vstv %s6
  %13 = vst [vmem:[#allocation2] sm:$0x1] %v12
  $region1: #{tpu_custom_call.1} parent=0
    #allocation3 [shape = 'u8[4096]{0}', space=vmem, size = 0x1000, scoped, tag = 'output window, operand 0']
    #allocation4 [shape = 's32[2]{0}', space=sflag, size = 0x8, scoped, tag = 'scoped memory for tpu_custom_call.1']
    %14 = vsyncpa [#allocation4], 0
    %s15 = scalar_lea.sflag [#allocation4], 1
    %16 = vsyncpa %s15, 0
    loop: start=0, step=1, limit=4
    $region2: #{tpu_custom_call.1} parent=1 // loop_pre_header
      _
    $region3: #{tpu_custom_call.1} parent=1 // loop_header
      %s18 = sphi 0, %s22
      %p19 = scmp.ge.s32.totalorder %s18, 4
      %s28 = sphi 0, %s30
      %s31 = sphi 0, %s28
      %s32 = sphi 0, %s31
      %s48 = sphi 0, %s32
      %s52 = sphi 0, %s52
      %s54 = sphi 0, %s52
      %s55 = sphi 0, %s54
      %s69 = sphi 0, %s55
      %s73 = sphi 0, %s73
      %s75 = sphi 0, %s73
      %s76 = sphi 0, %s75
      %s90 = sphi 0, %s76
      %s94 = sphi 0, %s94
      %s96 = sphi 0, %s94
      %s97 = sphi 0, %s96
      %s111 = sphi 0, %s97
      %s115 = sphi 0, %s115
      %s117 = sphi 0, %s115
      %s118 = sphi 0, %s117
      %s132 = sphi 0, %s118
      %s136 = sphi 0, %s136
      %s138 = sphi 0, %s136
      %s139 = sphi 0, %s138
      %s153 = sphi 0, %s139
      %s157 = sphi 0, %s157
      %s159 = sphi 0, %s157
      %s160 = sphi 0, %s159
      %s174 = sphi 0, %s160
      %s180 = sphi 0, %s182
      %s183 = sphi 0, %s180
      %s184 = sphi 0, %s183
      %s200 = sphi 0, %s184
    $region4: #{tpu_custom_call.1} parent=1 // loop_header_branch
      %21 = sbr.rel (%p19) target = $region8
    $region5: #{tpu_custom_call.1} parent=1 // loop_body
      %s23 = ssub.s32 %s18, 1
      %s24 = ssub.s32 %s18, 2
      %s25 = sadd.s32 %s18, 1
      %s26 = ssub.s32 %s18, %s25
      %p27 = scmp.eq.s32.totalorder %s26, 0
      %s29 = sadd.s32 %s28, 1
      %s30 = scalar_select %p27, %s28, %s29
      %p33 = pneg %p27
      %p34 = scmp.eq.s32.totalorder %s18, 1
      %p35 = por %p33, %p34
      %p36 = scmp.ne.s32.totalorder %s28, %s31
      %p37 = scmp.eq.s32.totalorder %s18, 0
      %p38 = por %p36, %p37
      %p39 = scmp.ne.s32.totalorder %s28, %s31
      %p40 = scmp.eq.s32.totalorder %s23, 1
      %p41 = por %p39, %p40
      %p42 = scmp.ne.s32.totalorder %s31, %s32
      %p43 = scmp.eq.s32.totalorder %s23, 0
      %p44 = por %p42, %p43
      %p45 = scmp.ne.s32.totalorder %s31, %s32
      %p46 = scmp.eq.s32.totalorder %s24, 1
      %p47 = por %p45, %p46
      %p49 = scmp.ne.s32.totalorder %s32, %s48
      %p50 = scmp.eq.s32.totalorder %s24, 0
      %p51 = por %p49, %p50
      %s53 = sadd.s32 %s52, 1
      %p56 = scmp.eq.s32.totalorder %s18, 1
      %p57 = scmp.ne.s32.totalorder %s52, %s54
      %p58 = scmp.eq.s32.totalorder %s18, 0
      %p59 = por %p57, %p58
      %p60 = scmp.ne.s32.totalorder %s52, %s54
      %p61 = scmp.eq.s32.totalorder %s23, 1
      %p62 = por %p60, %p61
      %p63 = scmp.ne.s32.totalorder %s54, %s55
      %p64 = scmp.eq.s32.totalorder %s23, 0
      %p65 = por %p63, %p64
      %p66 = scmp.ne.s32.totalorder %s54, %s55
      %p67 = scmp.eq.s32.totalorder %s24, 1
      %p68 = por %p66, %p67
      %p70 = scmp.ne.s32.totalorder %s55, %s69
      %p71 = scmp.eq.s32.totalorder %s24, 0
      %p72 = por %p70, %p71
      %s74 = sadd.s32 %s73, 1
      %p77 = scmp.eq.s32.totalorder %s18, 1
      %p78 = scmp.ne.s32.totalorder %s73, %s75
      %p79 = scmp.eq.s32.totalorder %s18, 0
      %p80 = por %p78, %p79
      %p81 = scmp.ne.s32.totalorder %s73, %s75
      %p82 = scmp.eq.s32.totalorder %s23, 1
      %p83 = por %p81, %p82
      %p84 = scmp.ne.s32.totalorder %s75, %s76
      %p85 = scmp.eq.s32.totalorder %s23, 0
      %p86 = por %p84, %p85
      %p87 = scmp.ne.s32.totalorder %s75, %s76
      %p88 = scmp.eq.s32.totalorder %s24, 1
      %p89 = por %p87, %p88
      %p91 = scmp.ne.s32.totalorder %s76, %s90
      %p92 = scmp.eq.s32.totalorder %s24, 0
      %p93 = por %p91, %p92
      %s95 = sadd.s32 %s94, 1
      %p98 = scmp.eq.s32.totalorder %s18, 1
      %p99 = scmp.ne.s32.totalorder %s94, %s96
      %p100 = scmp.eq.s32.totalorder %s18, 0
      %p101 = por %p99, %p100
      %p102 = scmp.ne.s32.totalorder %s94, %s96
      %p103 = scmp.eq.s32.totalorder %s23, 1
      %p104 = por %p102, %p103
      %p105 = scmp.ne.s32.totalorder %s96, %s97
      %p106 = scmp.eq.s32.totalorder %s23, 0
      %p107 = por %p105, %p106
      %p108 = scmp.ne.s32.totalorder %s96, %s97
      %p109 = scmp.eq.s32.totalorder %s24, 1
      %p110 = por %p108, %p109
      %p112 = scmp.ne.s32.totalorder %s97, %s111
      %p113 = scmp.eq.s32.totalorder %s24, 0
      %p114 = por %p112, %p113
      %s116 = sadd.s32 %s115, 1
      %p119 = scmp.eq.s32.totalorder %s18, 1
      %p120 = scmp.ne.s32.totalorder %s115, %s117
      %p121 = scmp.eq.s32.totalorder %s18, 0
      %p122 = por %p120, %p121
      %p123 = scmp.ne.s32.totalorder %s115, %s117
      %p124 = scmp.eq.s32.totalorder %s23, 1
      %p125 = por %p123, %p124
      %p126 = scmp.ne.s32.totalorder %s117, %s118
      %p127 = scmp.eq.s32.totalorder %s23, 0
      %p128 = por %p126, %p127
      %p129 = scmp.ne.s32.totalorder %s117, %s118
      %p130 = scmp.eq.s32.totalorder %s24, 1
      %p131 = por %p129, %p130
      %p133 = scmp.ne.s32.totalorder %s118, %s132
      %p134 = scmp.eq.s32.totalorder %s24, 0
      %p135 = por %p133, %p134
      %s137 = sadd.s32 %s136, 1
      %p140 = scmp.eq.s32.totalorder %s18, 1
      %p141 = scmp.ne.s32.totalorder %s136, %s138
      %p142 = scmp.eq.s32.totalorder %s18, 0
      %p143 = por %p141, %p142
      %p144 = scmp.ne.s32.totalorder %s136, %s138
      %p145 = scmp.eq.s32.totalorder %s23, 1
      %p146 = por %p144, %p145
      %p147 = scmp.ne.s32.totalorder %s138, %s139
      %p148 = scmp.eq.s32.totalorder %s23, 0
      %p149 = por %p147, %p148
      %p150 = scmp.ne.s32.totalorder %s138, %s139
      %p151 = scmp.eq.s32.totalorder %s24, 1
      %p152 = por %p150, %p151
      %p154 = scmp.ne.s32.totalorder %s139, %s153
      %p155 = scmp.eq.s32.totalorder %s24, 0
      %p156 = por %p154, %p155
      %s158 = sadd.s32 %s157, 1
      %p161 = scmp.eq.s32.totalorder %s18, 1
      %p162 = scmp.ne.s32.totalorder %s157, %s159
      %p163 = scmp.eq.s32.totalorder %s18, 0
      %p164 = por %p162, %p163
      %p165 = scmp.ne.s32.totalorder %s157, %s159
      %p166 = scmp.eq.s32.totalorder %s23, 1
      %p167 = por %p165, %p166
      %p168 = scmp.ne.s32.totalorder %s159, %s160
      %p169 = scmp.eq.s32.totalorder %s23, 0
      %p170 = por %p168, %p169
      %p171 = scmp.ne.s32.totalorder %s159, %s160
      %p172 = scmp.eq.s32.totalorder %s24, 1
      %p173 = por %p171, %p172
      %p175 = scmp.ne.s32.totalorder %s160, %s174
      %p176 = scmp.eq.s32.totalorder %s24, 0
      %p177 = por %p175, %p176
      %s178 = ssub.s32 %s18, %s25
      %p179 = scmp.eq.s32.totalorder %s178, 0
      %s181 = sadd.s32 %s180, 1
      %s182 = scalar_select %p179, %s180, %s181
      %p185 = pneg %p179
      %p186 = scmp.eq.s32.totalorder %s18, 1
      %p187 = por %p185, %p186
      %p188 = scmp.ne.s32.totalorder %s180, %s183
      %p189 = scmp.eq.s32.totalorder %s18, 0
      %p190 = por %p188, %p189
      %p191 = scmp.ne.s32.totalorder %s180, %s183
      %p192 = scmp.eq.s32.totalorder %s23, 1
      %p193 = por %p191, %p192
      %p194 = scmp.ne.s32.totalorder %s183, %s184
      %p195 = scmp.eq.s32.totalorder %s23, 0
      %p196 = por %p194, %p195
      %p197 = scmp.ne.s32.totalorder %s183, %s184
      %p198 = scmp.eq.s32.totalorder %s24, 1
      %p199 = por %p197, %p198
      %p201 = scmp.ne.s32.totalorder %s184, %s200
      %p202 = scmp.eq.s32.totalorder %s24, 0
      %p203 = por %p201, %p202
      %p204 = scmp.le.s32.totalorder 1, %s18
      %p205 = scmp.lt.s32.totalorder %s18, 3
      %p206 = pnand %p204, %p205
      %p207 = pneg %p206
      // Predicated region
      $region9: #{tpu_custom_call.1} parent=5 // pred_check
        _
      $region10: #{tpu_custom_call.1} parent=5 // pred_check_branch
        %209 = sbr.rel (%p206) target = $region12
      $region11: #{tpu_custom_call.1} parent=5 // pred_region
        %s210 = ssub.s32 %s18, 1
        // Predicated region
        $region13: #{tpu_custom_call.1} parent=11 // pred_check
          %p211 = pneg %p65
        $region14: #{tpu_custom_call.1} parent=11 // pred_check_branch
          %213 = sbr.rel (%p211) target = $region16
        $region15: #{tpu_custom_call.1} parent=11 // pred_region
          _
        $region16: #{tpu_custom_call.1} parent=11 // pred_fallthru
          _
        // Predicated region
        $region17: #{tpu_custom_call.1} parent=11 // pred_check
          %p214 = pneg %p86
        $region18: #{tpu_custom_call.1} parent=11 // pred_check_branch
          %216 = sbr.rel (%p214) target = $region20
        $region19: #{tpu_custom_call.1} parent=11 // pred_region
          _
        $region20: #{tpu_custom_call.1} parent=11 // pred_fallthru
          _
        // Predicated region
        $region21: #{tpu_custom_call.1} parent=11 // pred_check
          %p217 = pneg %p107
        $region22: #{tpu_custom_call.1} parent=11 // pred_check_branch
          %219 = sbr.rel (%p217) target = $region24
        $region23: #{tpu_custom_call.1} parent=11 // pred_region
          _
        $region24: #{tpu_custom_call.1} parent=11 // pred_fallthru
          _
        // Predicated region
        $region25: #{tpu_custom_call.1} parent=11 // pred_check
          %p220 = pneg %p128
        $region26: #{tpu_custom_call.1} parent=11 // pred_check_branch
          %222 = sbr.rel (%p220) target = $region28
        $region27: #{tpu_custom_call.1} parent=11 // pred_region
          _
        $region28: #{tpu_custom_call.1} parent=11 // pred_fallthru
          _
        // Predicated region
        $region29: #{tpu_custom_call.1} parent=11 // pred_check
          %p223 = pneg %p149
        $region30: #{tpu_custom_call.1} parent=11 // pred_check_branch
          %225 = sbr.rel (%p223) target = $region32
        $region31: #{tpu_custom_call.1} parent=11 // pred_region
          _
        $region32: #{tpu_custom_call.1} parent=11 // pred_fallthru
          _
        // Predicated region
        $region33: #{tpu_custom_call.1} parent=11 // pred_check
          %p226 = pneg %p170
        $region34: #{tpu_custom_call.1} parent=11 // pred_check_branch
          %228 = sbr.rel (%p226) target = $region36
        $region35: #{tpu_custom_call.1} parent=11 // pred_region
          _
        $region36: #{tpu_custom_call.1} parent=11 // pred_fallthru
          _
      $region12: #{tpu_custom_call.1} parent=5 // pred_fallthru
        _
      %p229 = scmp.lt.s32.totalorder %s18, 2
      // Predicated region
      $region37: #{tpu_custom_call.1} parent=5 // pred_check
        %p230 = pneg %p229
      $region38: #{tpu_custom_call.1} parent=5 // pred_check_branch
        %232 = sbr.rel (%p230) target = $region40
      $region39: #{tpu_custom_call.1} parent=5 // pred_region
        // Predicated region
        $region41: #{tpu_custom_call.1} parent=39 // pred_check
          %p233 = pneg %p38
        $region42: #{tpu_custom_call.1} parent=39 // pred_check_branch
          %235 = sbr.rel (%p233) target = $region44
        $region43: #{tpu_custom_call.1} parent=39 // pred_region
          %s236 = smul.u32 4, %s18
          %p237 = scmp.lt.s32.totalorder %s236, 7
          %s238 = scalar_select %p237, %s236, 7
          %s239 = smul.addr %s238, 8
          %s240 = scalar_lea.vmem %s0, %s239
          %s241 = smul.u32 4, %s18
        $region44: #{tpu_custom_call.1} parent=39 // pred_fallthru
          _
      $region40: #{tpu_custom_call.1} parent=5 // pred_fallthru
        _
      %p242 = scmp.le.s32.totalorder 1, %s18
      %p243 = scmp.lt.s32.totalorder %s18, 3
      %p244 = pnand %p242, %p243
      %p245 = pneg %p244
      // Predicated region
      $region45: #{tpu_custom_call.1} parent=5 // pred_check
        _
      $region46: #{tpu_custom_call.1} parent=5 // pred_check_branch
        %247 = sbr.rel (%p244) target = $region48
      $region47: #{tpu_custom_call.1} parent=5 // pred_region
        %s248 = ssub.s32 %s18, 1
        %s249 = smul.u32 4, %s23
        %p250 = scmp.lt.s32.totalorder %s249, 7
        %s251 = scalar_select %p250, %s249, 7
        %s252 = smul.addr %s251, 8
        %s253 = scalar_lea.vmem %s0, %s252
        %p254 = pneg %p44
        %p255 = pneg %p41
        %p256 = pneg %p65
        %p257 = pneg %p62
        %p258 = pneg %p86
        %p259 = pneg %p83
        %p260 = pneg %p107
        %p261 = pneg %p104
        %p262 = pneg %p128
        %p263 = pneg %p125
        %p264 = pneg %p149
        %p265 = pneg %p146
        %p266 = pneg %p170
        %p267 = pneg %p167
        %p268 = pneg %p196
        %p269 = pneg %p193
        %s270 = sand.u32 %s183, 1
        %s271 = scalar_lea.sflag [#allocation4], %s270
        %s272 = sand.u32 %s183, 1
        %s273 = smul.addr %s272, 4
        %s274 = scalar_lea.vmem [#allocation3], %s273
        %s275 = smul.u32 4, %s23
        %p276 = scmp.lt.s32.totalorder %s275, 7
        %s277 = scalar_select %p276, %s275, 7
        %s278 = smul.addr %s277, 8
        %s279 = scalar_lea.vmem %s0, %s278
        %s280 = smul.u32 4, %s23
        %v281 = vld [vmem:[%s279] sm:$0xff]
        %v282 = vld [vmem:[%s279 + $0x8] sm:$0xff]
        %v283 = vld [vmem:[%s279 + $0x10] sm:$0xff]
        %v284 = vld [vmem:[%s279 + $0x18] sm:$0xff]
        %v289 = vrot.slane %v281, 7
        %v290 = vrot.slane %v282, 7
        %v291 = vrot.slane %v283, 7
        %v292 = vrot.slane %v284, 7
        %vm297 = vcmask 1040384
        %v298 = vsel %vm297, 0.0, %v289
        %v299 = vsel %vm297, 0.0, %v290
        %v300 = vsel %vm297, 0.0, %v291
        %v301 = vsel %vm297, 0.0, %v292
        %v302 = vsel %vm297, %v289, 0.0
        %v303 = vsel %vm297, %v290, 0.0
        %v304 = vsel %vm297, %v291, 0.0
        %v305 = vsel %vm297, %v292, 0.0
        %vm314 = vcmask 1046528
        %v315 = vrot.slane %v298, 1
        %v316 = vrot.slane %v302, 1
        %v317 = vsel %vm314, %v315, %v316
        %v318 = vrot.slane %v299, 1
        %v319 = vrot.slane %v303, 1
        %v320 = vsel %vm314, %v318, %v319
        %v321 = vrot.slane %v300, 1
        %v322 = vrot.slane %v304, 1
        %v323 = vsel %vm314, %v321, %v322
        %v324 = vrot.slane %v301, 1
        %v325 = vrot.slane %v305, 1
        %v326 = vsel %vm314, %v324, %v325
        %327 = vrot.lane.b32.xlu0 %v317, 4
        %v328 = vpop.permute.xlu0 %327
        %329 = vrot.lane.b32.xlu0 %v320, 4
        %v330 = vpop.permute.xlu0 %329
        %331 = vrot.lane.b32.xlu0 %v323, 4
        %v332 = vpop.permute.xlu0 %331
        %333 = vrot.lane.b32.xlu0 %v326, 4
        %v334 = vpop.permute.xlu0 %333
        %vm339 = vcmask 1045504
        %v340 = vrot.slane %v298, 2
        %v341 = vrot.slane %v302, 2
        %v342 = vsel %vm339, %v340, %v341
        %v343 = vrot.slane %v299, 2
        %v344 = vrot.slane %v303, 2
        %v345 = vsel %vm339, %v343, %v344
        %v346 = vrot.slane %v300, 2
        %v347 = vrot.slane %v304, 2
        %v348 = vsel %vm339, %v346, %v347
        %v349 = vrot.slane %v301, 2
        %v350 = vrot.slane %v305, 2
        %v351 = vsel %vm339, %v349, %v350
        %352 = vrot.lane.b32.xlu0 %v342, 8
        %v353 = vpop.permute.xlu0 %352
        %354 = vrot.lane.b32.xlu0 %v345, 8
        %v355 = vpop.permute.xlu0 %354
        %356 = vrot.lane.b32.xlu0 %v348, 8
        %v357 = vpop.permute.xlu0 %356
        %358 = vrot.lane.b32.xlu0 %v351, 8
        %v359 = vpop.permute.xlu0 %358
        %vm364 = vcmask 31744
        %v365 = vsel %vm364, %v298, %v328
        %v366 = vsel %vm364, %v299, %v330
        %v367 = vsel %vm364, %v300, %v332
        %v368 = vsel %vm364, %v301, %v334
        %vm369 = vcmask 64512
        %v370 = vsel %vm369, %v365, %v353
        %v371 = vsel %vm369, %v366, %v355
        %v372 = vsel %vm369, %v367, %v357
        %v373 = vsel %vm369, %v368, %v359
        %v374 = vld [vmem:[%s1] sm:$0xff]
        %v375 = vld [vmem:[%s1 + $0x8] sm:$0xf]
        %v376 = vld [vmem:[%s2] sm:$0x1]
        %v378 = vlaneseq
        %v379 = vshrl.u32 %v378, 7
        %v380 = vsub.s32 0, %v379
        %v381 = vrot.slane %v376, %v380
        %vm383 = vcmask 97280
        %v385 = vsel %vm383, %v370, 0
        %v388 = vsel %vm383, %v371, 0
        %v391 = vsel %vm383, %v372, 0
        %v394 = vsel %vm383, %v373, 0
        %vm396 = vcmask 1043456
        %v398 = vsel %vm396, %v375, 0
        %400 = vmatprep.subr.mxu0 0.0
        %401 = vmatpush1.msra.mxu0 0.0
        %402 = vmatprep.subr.mxu0 0.0
        %403 = vmatpush1.msra.mxu0 0.0
        %404 = vmatprep.subr.mxu0 0.0
        %405 = vmatpush1.msra.mxu0 0.0
        %406 = vmatprep.subr.mxu0 0.0
        %407 = vmatpush1.msra.mxu0 0.0
        %408 = vmatprep.subr.mxu0 0.0
        %409 = vmatpush1.msra.mxu0 0.0
        %410 = vmatprep.subr.mxu0 0.0
        %411 = vmatpush1.msra.mxu0 0.0
        %412 = vmatprep.subr.mxu0 0.0
        %413 = vmatpush1.msra.mxu0 0.0
        %414 = vmatprep.subr.mxu0 0.0
        %415 = vmatpush1.msra.mxu0 0.0
        %416 = vmatprep.subr.mxu0 0.0
        %417 = vmatpush1.msra.mxu0 0.0
        %418 = vmatprep.subr.mxu0 0.0
        %419 = vmatpush1.msra.mxu0 0.0
        %420 = vmatprep.subr.mxu0 0.0
        %421 = vmatpush1.msra.mxu0 0.0
        %422 = vmatprep.subr.mxu0 0.0
        %423 = vmatpush1.msra.mxu0 0.0
        %424 = vmatprep.subr.mxu0 0.0
        %425 = vmatpush1.msra.mxu0 0.0
        %426 = vmatprep.subr.mxu0 0.0
        %427 = vmatpush1.msra.mxu0 0.0
        %428 = vmatprep.subr.mxu0 0.0
        %429 = vmatpush1.msra.mxu0 %v398
        %430 = vmatprep.subr.mxu0 0.0
        %431 = vmatpush1.msra.mxu0 %v374
        %432 = vmatprep.subr.mxu0 0.0
        %433 = vmatpush2.msra.mxu0 0.0
        %434 = vmatprep.subr.mxu0 0.0
        %435 = vmatpush2.msra.mxu0 0.0
        %436 = vmatprep.subr.mxu0 0.0
        %437 = vmatpush2.msra.mxu0 0.0
        %438 = vmatprep.subr.mxu0 0.0
        %439 = vmatpush2.msra.mxu0 0.0
        %440 = vmatprep.subr.mxu0 0.0
        %441 = vmatpush2.msra.mxu0 0.0
        %442 = vmatprep.subr.mxu0 0.0
        %443 = vmatpush2.msra.mxu0 0.0
        %444 = vmatprep.subr.mxu0 0.0
        %445 = vmatpush2.msra.mxu0 0.0
        %446 = vmatprep.subr.mxu0 0.0
        %447 = vmatpush2.msra.mxu0 0.0
        %448 = vmatprep.subr.mxu0 0.0
        %449 = vmatpush2.msra.mxu0 0.0
        %450 = vmatprep.subr.mxu0 0.0
        %451 = vmatpush2.msra.mxu0 0.0
        %452 = vmatprep.subr.mxu0 0.0
        %453 = vmatpush2.msra.mxu0 0.0
        %454 = vmatprep.subr.mxu0 0.0
        %455 = vmatpush2.msra.mxu0 0.0
        %456 = vmatprep.subr.mxu0 0.0
        %457 = vmatpush2.msra.mxu0 0.0
        %458 = vmatprep.subr.mxu0 0.0
        %459 = vmatpush2.msra.mxu0 0.0
        %460 = vmatprep.subr.mxu0 0.0
        %461 = vmatpush2.msra.mxu0 0.0
        %462 = vmatprep.subr.mxu0 0.0
        %463 = vmatpush2.msra.mxu0 0.0
        %464 = vmatprep.mubr.f32.mxu0 0.0
        %465 = vmatmul.mubr.f32.gmra.mxu0 %v385
        %v466 = vpop.f32.mrf.mxu0
        %v467 = vadd.f32 %v381, %v466
        %v468 = vpop.f32.mrf.mxu0
        %469 = vmatprep.mubr.f32.mxu0 0.0
        %470 = vmatmul.mubr.f32.gmra.mxu0 %v388
        %v471 = vpop.f32.mrf.mxu0
        %v472 = vadd.f32 %v381, %v471
        %v473 = vpop.f32.mrf.mxu0
        %474 = vmatprep.mubr.f32.mxu0 0.0
        %475 = vmatmul.mubr.f32.gmra.mxu0 %v391
        %v476 = vpop.f32.mrf.mxu0
        %v477 = vadd.f32 %v381, %v476
        %v478 = vpop.f32.mrf.mxu0
        %479 = vmatprep.mubr.f32.mxu0 0.0
        %480 = vmatmul.mubr.f32.gmra.mxu0 %v394
        %v481 = vpop.f32.mrf.mxu0
        %v482 = vadd.f32 %v381, %v481
        %v483 = vpop.f32.mrf.mxu0
        %484 = vdwg.mxu0
        %v485 = vmax.f32 %v467, 0.0
        %v486 = vmax.f32 %v472, 0.0
        %v487 = vmax.f32 %v477, 0.0
        %v488 = vmax.f32 %v482, 0.0
        %v489 = vld [vmem:[%s3] sm:$0xff]
        %v490 = vld [vmem:[%s4] sm:$0xff]
        %492 = vset.pattern.permute.xlu0 0
        %493 = vperm.xlu0 %492, %v490
        %v494 = vpop.permute.xlu0 %493
        %v497 = vsel %vm369, %v489, 0
        %499 = vmatprep.subr.mxu0 0.0
        %500 = vmatpush1.msra.mxu0 0.0
        %501 = vmatprep.subr.mxu0 0.0
        %502 = vmatpush1.msra.mxu0 0.0
        %503 = vmatprep.subr.mxu0 0.0
        %504 = vmatpush1.msra.mxu0 0.0
        %505 = vmatprep.subr.mxu0 0.0
        %506 = vmatpush1.msra.mxu0 0.0
        %507 = vmatprep.subr.mxu0 0.0
        %508 = vmatpush1.msra.mxu0 0.0
        %509 = vmatprep.subr.mxu0 0.0
        %510 = vmatpush1.msra.mxu0 0.0
        %511 = vmatprep.subr.mxu0 0.0
        %512 = vmatpush1.msra.mxu0 0.0
        %513 = vmatprep.subr.mxu0 0.0
        %514 = vmatpush1.msra.mxu0 0.0
        %515 = vmatprep.subr.mxu0 0.0
        %516 = vmatpush1.msra.mxu0 0.0
        %517 = vmatprep.subr.mxu0 0.0
        %518 = vmatpush1.msra.mxu0 0.0
        %519 = vmatprep.subr.mxu0 0.0
        %520 = vmatpush1.msra.mxu0 0.0
        %521 = vmatprep.subr.mxu0 0.0
        %522 = vmatpush1.msra.mxu0 0.0
        %523 = vmatprep.subr.mxu0 0.0
        %524 = vmatpush1.msra.mxu0 0.0
        %525 = vmatprep.subr.mxu0 0.0
        %526 = vmatpush1.msra.mxu0 0.0
        %527 = vmatprep.subr.mxu0 0.0
        %528 = vmatpush1.msra.mxu0 0.0
        %529 = vmatprep.subr.mxu0 0.0
        %530 = vmatpush1.msra.mxu0 %v485
        %531 = vmatprep.subr.mxu0 0.0
        %532 = vmatpush2.msra.mxu0 0.0
        %533 = vmatprep.subr.mxu0 0.0
        %534 = vmatpush2.msra.mxu0 0.0
        %535 = vmatprep.subr.mxu0 0.0
        %536 = vmatpush2.msra.mxu0 0.0
        %537 = vmatprep.subr.mxu0 0.0
        %538 = vmatpush2.msra.mxu0 0.0
        %539 = vmatprep.subr.mxu0 0.0
        %540 = vmatpush2.msra.mxu0 0.0
        %541 = vmatprep.subr.mxu0 0.0
        %542 = vmatpush2.msra.mxu0 0.0
        %543 = vmatprep.subr.mxu0 0.0
        %544 = vmatpush2.msra.mxu0 0.0
        %545 = vmatprep.subr.mxu0 0.0
        %546 = vmatpush2.msra.mxu0 0.0
        %547 = vmatprep.subr.mxu0 0.0
        %548 = vmatpush2.msra.mxu0 0.0
        %549 = vmatprep.subr.mxu0 0.0
        %550 = vmatpush2.msra.mxu0 0.0
        %551 = vmatprep.subr.mxu0 0.0
        %552 = vmatpush2.msra.mxu0 0.0
        %553 = vmatprep.subr.mxu0 0.0
        %554 = vmatpush2.msra.mxu0 0.0
        %555 = vmatprep.subr.mxu0 0.0
        %556 = vmatpush2.msra.mxu0 0.0
        %557 = vmatprep.subr.mxu0 0.0
        %558 = vmatpush2.msra.mxu0 0.0
        %559 = vmatprep.subr.mxu0 0.0
        %560 = vmatpush2.msra.mxu0 0.0
        %561 = vmatprep.subr.mxu0 0.0
        %562 = vmatpush2.msra.mxu0 0.0
        %563 = vmatprep.mubr.f32.mxu0 0.0
        %564 = vmatmul.mubr.f32.gmra.mxu0 %v497
        %v565 = vpop.f32.mrf.mxu0
        %v566 = vadd.f32 %v494, %v565
        %v567 = vpop.f32.mrf.mxu0
        %568 = vdwg.mxu0
        %569 = vmatprep.subr.mxu0 0.0
        %570 = vmatpush1.msra.mxu0 0.0
        %571 = vmatprep.subr.mxu0 0.0
        %572 = vmatpush1.msra.mxu0 0.0
        %573 = vmatprep.subr.mxu0 0.0
        %574 = vmatpush1.msra.mxu0 0.0
        %575 = vmatprep.subr.mxu0 0.0
        %576 = vmatpush1.msra.mxu0 0.0
        %577 = vmatprep.subr.mxu0 0.0
        %578 = vmatpush1.msra.mxu0 0.0
        %579 = vmatprep.subr.mxu0 0.0
        %580 = vmatpush1.msra.mxu0 0.0
        %581 = vmatprep.subr.mxu0 0.0
        %582 = vmatpush1.msra.mxu0 0.0
        %583 = vmatprep.subr.mxu0 0.0
        %584 = vmatpush1.msra.mxu0 0.0
        %585 = vmatprep.subr.mxu0 0.0
        %586 = vmatpush1.msra.mxu0 0.0
        %587 = vmatprep.subr.mxu0 0.0
        %588 = vmatpush1.msra.mxu0 0.0
        %589 = vmatprep.subr.mxu0 0.0
        %590 = vmatpush1.msra.mxu0 0.0
        %591 = vmatprep.subr.mxu0 0.0
        %592 = vmatpush1.msra.mxu0 0.0
        %593 = vmatprep.subr.mxu0 0.0
        %594 = vmatpush1.msra.mxu0 0.0
        %595 = vmatprep.subr.mxu0 0.0
        %596 = vmatpush1.msra.mxu0 0.0
        %597 = vmatprep.subr.mxu0 0.0
        %598 = vmatpush1.msra.mxu0 0.0
        %599 = vmatprep.subr.mxu0 0.0
        %600 = vmatpush1.msra.mxu0 %v486
        %601 = vmatprep.subr.mxu0 0.0
        %602 = vmatpush2.msra.mxu0 0.0
        %603 = vmatprep.subr.mxu0 0.0
        %604 = vmatpush2.msra.mxu0 0.0
        %605 = vmatprep.subr.mxu0 0.0
        %606 = vmatpush2.msra.mxu0 0.0
        %607 = vmatprep.subr.mxu0 0.0
        %608 = vmatpush2.msra.mxu0 0.0
        %609 = vmatprep.subr.mxu0 0.0
        %610 = vmatpush2.msra.mxu0 0.0
        %611 = vmatprep.subr.mxu0 0.0
        %612 = vmatpush2.msra.mxu0 0.0
        %613 = vmatprep.subr.mxu0 0.0
        %614 = vmatpush2.msra.mxu0 0.0
        %615 = vmatprep.subr.mxu0 0.0
        %616 = vmatpush2.msra.mxu0 0.0
        %617 = vmatprep.subr.mxu0 0.0
        %618 = vmatpush2.msra.mxu0 0.0
        %619 = vmatprep.subr.mxu0 0.0
        %620 = vmatpush2.msra.mxu0 0.0
        %621 = vmatprep.subr.mxu0 0.0
        %622 = vmatpush2.msra.mxu0 0.0
        %623 = vmatprep.subr.mxu0 0.0
        %624 = vmatpush2.msra.mxu0 0.0
        %625 = vmatprep.subr.mxu0 0.0
        %626 = vmatpush2.msra.mxu0 0.0
        %627 = vmatprep.subr.mxu0 0.0
        %628 = vmatpush2.msra.mxu0 0.0
        %629 = vmatprep.subr.mxu0 0.0
        %630 = vmatpush2.msra.mxu0 0.0
        %631 = vmatprep.subr.mxu0 0.0
        %632 = vmatpush2.msra.mxu0 0.0
        %633 = vmatprep.mubr.f32.mxu0 0.0
        %634 = vmatmul.mubr.f32.gmra.mxu0 %v497
        %v635 = vpop.f32.mrf.mxu0
        %v636 = vadd.f32 %v494, %v635
        %v637 = vpop.f32.mrf.mxu0
        %638 = vdwg.mxu0
        %639 = vmatprep.subr.mxu0 0.0
        %640 = vmatpush1.msra.mxu0 0.0
        %641 = vmatprep.subr.mxu0 0.0
        %642 = vmatpush1.msra.mxu0 0.0
        %643 = vmatprep.subr.mxu0 0.0
        %644 = vmatpush1.msra.mxu0 0.0
        %645 = vmatprep.subr.mxu0 0.0
        %646 = vmatpush1.msra.mxu0 0.0
        %647 = vmatprep.subr.mxu0 0.0
        %648 = vmatpush1.msra.mxu0 0.0
        %649 = vmatprep.subr.mxu0 0.0
        %650 = vmatpush1.msra.mxu0 0.0
        %651 = vmatprep.subr.mxu0 0.0
        %652 = vmatpush1.msra.mxu0 0.0
        %653 = vmatprep.subr.mxu0 0.0
        %654 = vmatpush1.msra.mxu0 0.0
        %655 = vmatprep.subr.mxu0 0.0
        %656 = vmatpush1.msra.mxu0 0.0
        %657 = vmatprep.subr.mxu0 0.0
        %658 = vmatpush1.msra.mxu0 0.0
        %659 = vmatprep.subr.mxu0 0.0
        %660 = vmatpush1.msra.mxu0 0.0
        %661 = vmatprep.subr.mxu0 0.0
        %662 = vmatpush1.msra.mxu0 0.0
        %663 = vmatprep.subr.mxu0 0.0
        %664 = vmatpush1.msra.mxu0 0.0
        %665 = vmatprep.subr.mxu0 0.0
        %666 = vmatpush1.msra.mxu0 0.0
        %667 = vmatprep.subr.mxu0 0.0
        %668 = vmatpush1.msra.mxu0 0.0
        %669 = vmatprep.subr.mxu0 0.0
        %670 = vmatpush1.msra.mxu0 %v487
        %671 = vmatprep.subr.mxu0 0.0
        %672 = vmatpush2.msra.mxu0 0.0
        %673 = vmatprep.subr.mxu0 0.0
        %674 = vmatpush2.msra.mxu0 0.0
        %675 = vmatprep.subr.mxu0 0.0
        %676 = vmatpush2.msra.mxu0 0.0
        %677 = vmatprep.subr.mxu0 0.0
        %678 = vmatpush2.msra.mxu0 0.0
        %679 = vmatprep.subr.mxu0 0.0
        %680 = vmatpush2.msra.mxu0 0.0
        %681 = vmatprep.subr.mxu0 0.0
        %682 = vmatpush2.msra.mxu0 0.0
        %683 = vmatprep.subr.mxu0 0.0
        %684 = vmatpush2.msra.mxu0 0.0
        %685 = vmatprep.subr.mxu0 0.0
        %686 = vmatpush2.msra.mxu0 0.0
        %687 = vmatprep.subr.mxu0 0.0
        %688 = vmatpush2.msra.mxu0 0.0
        %689 = vmatprep.subr.mxu0 0.0
        %690 = vmatpush2.msra.mxu0 0.0
        %691 = vmatprep.subr.mxu0 0.0
        %692 = vmatpush2.msra.mxu0 0.0
        %693 = vmatprep.subr.mxu0 0.0
        %694 = vmatpush2.msra.mxu0 0.0
        %695 = vmatprep.subr.mxu0 0.0
        %696 = vmatpush2.msra.mxu0 0.0
        %697 = vmatprep.subr.mxu0 0.0
        %698 = vmatpush2.msra.mxu0 0.0
        %699 = vmatprep.subr.mxu0 0.0
        %700 = vmatpush2.msra.mxu0 0.0
        %701 = vmatprep.subr.mxu0 0.0
        %702 = vmatpush2.msra.mxu0 0.0
        %703 = vmatprep.mubr.f32.mxu0 0.0
        %704 = vmatmul.mubr.f32.gmra.mxu0 %v497
        %v705 = vpop.f32.mrf.mxu0
        %v706 = vadd.f32 %v494, %v705
        %v707 = vpop.f32.mrf.mxu0
        %708 = vdwg.mxu0
        %709 = vmatprep.subr.mxu0 0.0
        %710 = vmatpush1.msra.mxu0 0.0
        %711 = vmatprep.subr.mxu0 0.0
        %712 = vmatpush1.msra.mxu0 0.0
        %713 = vmatprep.subr.mxu0 0.0
        %714 = vmatpush1.msra.mxu0 0.0
        %715 = vmatprep.subr.mxu0 0.0
        %716 = vmatpush1.msra.mxu0 0.0
        %717 = vmatprep.subr.mxu0 0.0
        %718 = vmatpush1.msra.mxu0 0.0
        %719 = vmatprep.subr.mxu0 0.0
        %720 = vmatpush1.msra.mxu0 0.0
        %721 = vmatprep.subr.mxu0 0.0
        %722 = vmatpush1.msra.mxu0 0.0
        %723 = vmatprep.subr.mxu0 0.0
        %724 = vmatpush1.msra.mxu0 0.0
        %725 = vmatprep.subr.mxu0 0.0
        %726 = vmatpush1.msra.mxu0 0.0
        %727 = vmatprep.subr.mxu0 0.0
        %728 = vmatpush1.msra.mxu0 0.0
        %729 = vmatprep.subr.mxu0 0.0
        %730 = vmatpush1.msra.mxu0 0.0
        %731 = vmatprep.subr.mxu0 0.0
        %732 = vmatpush1.msra.mxu0 0.0
        %733 = vmatprep.subr.mxu0 0.0
        %734 = vmatpush1.msra.mxu0 0.0
        %735 = vmatprep.subr.mxu0 0.0
        %736 = vmatpush1.msra.mxu0 0.0
        %737 = vmatprep.subr.mxu0 0.0
        %738 = vmatpush1.msra.mxu0 0.0
        %739 = vmatprep.subr.mxu0 0.0
        %740 = vmatpush1.msra.mxu0 %v488
        %741 = vmatprep.subr.mxu0 0.0
        %742 = vmatpush2.msra.mxu0 0.0
        %743 = vmatprep.subr.mxu0 0.0
        %744 = vmatpush2.msra.mxu0 0.0
        %745 = vmatprep.subr.mxu0 0.0
        %746 = vmatpush2.msra.mxu0 0.0
        %747 = vmatprep.subr.mxu0 0.0
        %748 = vmatpush2.msra.mxu0 0.0
        %749 = vmatprep.subr.mxu0 0.0
        %750 = vmatpush2.msra.mxu0 0.0
        %751 = vmatprep.subr.mxu0 0.0
        %752 = vmatpush2.msra.mxu0 0.0
        %753 = vmatprep.subr.mxu0 0.0
        %754 = vmatpush2.msra.mxu0 0.0
        %755 = vmatprep.subr.mxu0 0.0
        %756 = vmatpush2.msra.mxu0 0.0
        %757 = vmatprep.subr.mxu0 0.0
        %758 = vmatpush2.msra.mxu0 0.0
        %759 = vmatprep.subr.mxu0 0.0
        %760 = vmatpush2.msra.mxu0 0.0
        %761 = vmatprep.subr.mxu0 0.0
        %762 = vmatpush2.msra.mxu0 0.0
        %763 = vmatprep.subr.mxu0 0.0
        %764 = vmatpush2.msra.mxu0 0.0
        %765 = vmatprep.subr.mxu0 0.0
        %766 = vmatpush2.msra.mxu0 0.0
        %767 = vmatprep.subr.mxu0 0.0
        %768 = vmatpush2.msra.mxu0 0.0
        %769 = vmatprep.subr.mxu0 0.0
        %770 = vmatpush2.msra.mxu0 0.0
        %771 = vmatprep.subr.mxu0 0.0
        %772 = vmatpush2.msra.mxu0 0.0
        %773 = vmatprep.mubr.f32.mxu0 0.0
        %774 = vmatmul.mubr.f32.gmra.mxu0 %v497
        %v775 = vpop.f32.mrf.mxu0
        %v776 = vadd.f32 %v494, %v775
        %v777 = vpop.f32.mrf.mxu0
        %778 = vdwg.mxu0
        %v779 = vld [vmem:[%s5] sm:$0xff]
        %v780 = vld [vmem:[#allocation2] sm:$0x1]
        %v782 = vlaneseq
        %v783 = vshrl.u32 %v782, 7
        %v784 = vsub.s32 0, %v783
        %v785 = vrot.slane %v780, %v784
        %v788 = vsel %vm369, %v566, 0
        %790 = vmatprep.subr.mxu0 0.0
        %791 = vmatpush1.msra.mxu0 0.0
        %792 = vmatprep.subr.mxu0 0.0
        %793 = vmatpush1.msra.mxu0 0.0
        %794 = vmatprep.subr.mxu0 0.0
        %795 = vmatpush1.msra.mxu0 0.0
        %796 = vmatprep.subr.mxu0 0.0
        %797 = vmatpush1.msra.mxu0 0.0
        %798 = vmatprep.subr.mxu0 0.0
        %799 = vmatpush1.msra.mxu0 0.0
        %800 = vmatprep.subr.mxu0 0.0
        %801 = vmatpush1.msra.mxu0 0.0
        %802 = vmatprep.subr.mxu0 0.0
        %803 = vmatpush1.msra.mxu0 0.0
        %804 = vmatprep.subr.mxu0 0.0
        %805 = vmatpush1.msra.mxu0 0.0
        %806 = vmatprep.subr.mxu0 0.0
        %807 = vmatpush1.msra.mxu0 0.0
        %808 = vmatprep.subr.mxu0 0.0
        %809 = vmatpush1.msra.mxu0 0.0
        %810 = vmatprep.subr.mxu0 0.0
        %811 = vmatpush1.msra.mxu0 0.0
        %812 = vmatprep.subr.mxu0 0.0
        %813 = vmatpush1.msra.mxu0 0.0
        %814 = vmatprep.subr.mxu0 0.0
        %815 = vmatpush1.msra.mxu0 0.0
        %816 = vmatprep.subr.mxu0 0.0
        %817 = vmatpush1.msra.mxu0 0.0
        %818 = vmatprep.subr.mxu0 0.0
        %819 = vmatpush1.msra.mxu0 0.0
        %820 = vmatprep.subr.mxu0 0.0
        %821 = vmatpush1.msra.mxu0 %v779
        %822 = vmatprep.subr.mxu0 0.0
        %823 = vmatpush2.msra.mxu0 0.0
        %824 = vmatprep.subr.mxu0 0.0
        %825 = vmatpush2.msra.mxu0 0.0
        %826 = vmatprep.subr.mxu0 0.0
        %827 = vmatpush2.msra.mxu0 0.0
        %828 = vmatprep.subr.mxu0 0.0
        %829 = vmatpush2.msra.mxu0 0.0
        %830 = vmatprep.subr.mxu0 0.0
        %831 = vmatpush2.msra.mxu0 0.0
        %832 = vmatprep.subr.mxu0 0.0
        %833 = vmatpush2.msra.mxu0 0.0
        %834 = vmatprep.subr.mxu0 0.0
        %835 = vmatpush2.msra.mxu0 0.0
        %836 = vmatprep.subr.mxu0 0.0
        %837 = vmatpush2.msra.mxu0 0.0
        %838 = vmatprep.subr.mxu0 0.0
        %839 = vmatpush2.msra.mxu0 0.0
        %840 = vmatprep.subr.mxu0 0.0
        %841 = vmatpush2.msra.mxu0 0.0
        %842 = vmatprep.subr.mxu0 0.0
        %843 = vmatpush2.msra.mxu0 0.0
        %844 = vmatprep.subr.mxu0 0.0
        %845 = vmatpush2.msra.mxu0 0.0
        %846 = vmatprep.subr.mxu0 0.0
        %847 = vmatpush2.msra.mxu0 0.0
        %848 = vmatprep.subr.mxu0 0.0
        %849 = vmatpush2.msra.mxu0 0.0
        %850 = vmatprep.subr.mxu0 0.0
        %851 = vmatpush2.msra.mxu0 0.0
        %852 = vmatprep.subr.mxu0 0.0
        %853 = vmatpush2.msra.mxu0 0.0
        %854 = vmatprep.mubr.f32.mxu0 0.0
        %855 = vmatmul.mubr.f32.gmra.mxu0 %v788
        %v856 = vpop.f32.mrf.mxu0
        %v857 = vadd.f32 %v785, %v856
        %v858 = vpop.f32.mrf.mxu0
        %859 = vdwg.mxu0
        %v861 = vsel %vm369, %v636, 0
        %863 = vmatprep.subr.mxu0 0.0
        %864 = vmatpush1.msra.mxu0 0.0
        %865 = vmatprep.subr.mxu0 0.0
        %866 = vmatpush1.msra.mxu0 0.0
        %867 = vmatprep.subr.mxu0 0.0
        %868 = vmatpush1.msra.mxu0 0.0
        %869 = vmatprep.subr.mxu0 0.0
        %870 = vmatpush1.msra.mxu0 0.0
        %871 = vmatprep.subr.mxu0 0.0
        %872 = vmatpush1.msra.mxu0 0.0
        %873 = vmatprep.subr.mxu0 0.0
        %874 = vmatpush1.msra.mxu0 0.0
        %875 = vmatprep.subr.mxu0 0.0
        %876 = vmatpush1.msra.mxu0 0.0
        %877 = vmatprep.subr.mxu0 0.0
        %878 = vmatpush1.msra.mxu0 0.0
        %879 = vmatprep.subr.mxu0 0.0
        %880 = vmatpush1.msra.mxu0 0.0
        %881 = vmatprep.subr.mxu0 0.0
        %882 = vmatpush1.msra.mxu0 0.0
        %883 = vmatprep.subr.mxu0 0.0
        %884 = vmatpush1.msra.mxu0 0.0
        %885 = vmatprep.subr.mxu0 0.0
        %886 = vmatpush1.msra.mxu0 0.0
        %887 = vmatprep.subr.mxu0 0.0
        %888 = vmatpush1.msra.mxu0 0.0
        %889 = vmatprep.subr.mxu0 0.0
        %890 = vmatpush1.msra.mxu0 0.0
        %891 = vmatprep.subr.mxu0 0.0
        %892 = vmatpush1.msra.mxu0 0.0
        %893 = vmatprep.subr.mxu0 0.0
        %894 = vmatpush1.msra.mxu0 %v779
        %895 = vmatprep.subr.mxu0 0.0
        %896 = vmatpush2.msra.mxu0 0.0
        %897 = vmatprep.subr.mxu0 0.0
        %898 = vmatpush2.msra.mxu0 0.0
        %899 = vmatprep.subr.mxu0 0.0
        %900 = vmatpush2.msra.mxu0 0.0
        %901 = vmatprep.subr.mxu0 0.0
        %902 = vmatpush2.msra.mxu0 0.0
        %903 = vmatprep.subr.mxu0 0.0
        %904 = vmatpush2.msra.mxu0 0.0
        %905 = vmatprep.subr.mxu0 0.0
        %906 = vmatpush2.msra.mxu0 0.0
        %907 = vmatprep.subr.mxu0 0.0
        %908 = vmatpush2.msra.mxu0 0.0
        %909 = vmatprep.subr.mxu0 0.0
        %910 = vmatpush2.msra.mxu0 0.0
        %911 = vmatprep.subr.mxu0 0.0
        %912 = vmatpush2.msra.mxu0 0.0
        %913 = vmatprep.subr.mxu0 0.0
        %914 = vmatpush2.msra.mxu0 0.0
        %915 = vmatprep.subr.mxu0 0.0
        %916 = vmatpush2.msra.mxu0 0.0
        %917 = vmatprep.subr.mxu0 0.0
        %918 = vmatpush2.msra.mxu0 0.0
        %919 = vmatprep.subr.mxu0 0.0
        %920 = vmatpush2.msra.mxu0 0.0
        %921 = vmatprep.subr.mxu0 0.0
        %922 = vmatpush2.msra.mxu0 0.0
        %923 = vmatprep.subr.mxu0 0.0
        %924 = vmatpush2.msra.mxu0 0.0
        %925 = vmatprep.subr.mxu0 0.0
        %926 = vmatpush2.msra.mxu0 0.0
        %927 = vmatprep.mubr.f32.mxu0 0.0
        %928 = vmatmul.mubr.f32.gmra.mxu0 %v861
        %v929 = vpop.f32.mrf.mxu0
        %v930 = vadd.f32 %v785, %v929
        %v931 = vpop.f32.mrf.mxu0
        %932 = vdwg.mxu0
        %v934 = vsel %vm369, %v706, 0
        %936 = vmatprep.subr.mxu0 0.0
        %937 = vmatpush1.msra.mxu0 0.0
        %938 = vmatprep.subr.mxu0 0.0
        %939 = vmatpush1.msra.mxu0 0.0
        %940 = vmatprep.subr.mxu0 0.0
        %941 = vmatpush1.msra.mxu0 0.0
        %942 = vmatprep.subr.mxu0 0.0
        %943 = vmatpush1.msra.mxu0 0.0
        %944 = vmatprep.subr.mxu0 0.0
        %945 = vmatpush1.msra.mxu0 0.0
        %946 = vmatprep.subr.mxu0 0.0
        %947 = vmatpush1.msra.mxu0 0.0
        %948 = vmatprep.subr.mxu0 0.0
        %949 = vmatpush1.msra.mxu0 0.0
        %950 = vmatprep.subr.mxu0 0.0
        %951 = vmatpush1.msra.mxu0 0.0
        %952 = vmatprep.subr.mxu0 0.0
        %953 = vmatpush1.msra.mxu0 0.0
        %954 = vmatprep.subr.mxu0 0.0
        %955 = vmatpush1.msra.mxu0 0.0
        %956 = vmatprep.subr.mxu0 0.0
        %957 = vmatpush1.msra.mxu0 0.0
        %958 = vmatprep.subr.mxu0 0.0
        %959 = vmatpush1.msra.mxu0 0.0
        %960 = vmatprep.subr.mxu0 0.0
        %961 = vmatpush1.msra.mxu0 0.0
        %962 = vmatprep.subr.mxu0 0.0
        %963 = vmatpush1.msra.mxu0 0.0
        %964 = vmatprep.subr.mxu0 0.0
        %965 = vmatpush1.msra.mxu0 0.0
        %966 = vmatprep.subr.mxu0 0.0
        %967 = vmatpush1.msra.mxu0 %v779
        %968 = vmatprep.subr.mxu0 0.0
        %969 = vmatpush2.msra.mxu0 0.0
        %970 = vmatprep.subr.mxu0 0.0
        %971 = vmatpush2.msra.mxu0 0.0
        %972 = vmatprep.subr.mxu0 0.0
        %973 = vmatpush2.msra.mxu0 0.0
        %974 = vmatprep.subr.mxu0 0.0
        %975 = vmatpush2.msra.mxu0 0.0
        %976 = vmatprep.subr.mxu0 0.0
        %977 = vmatpush2.msra.mxu0 0.0
        %978 = vmatprep.subr.mxu0 0.0
        %979 = vmatpush2.msra.mxu0 0.0
        %980 = vmatprep.subr.mxu0 0.0
        %981 = vmatpush2.msra.mxu0 0.0
        %982 = vmatprep.subr.mxu0 0.0
        %983 = vmatpush2.msra.mxu0 0.0
        %984 = vmatprep.subr.mxu0 0.0
        %985 = vmatpush2.msra.mxu0 0.0
        %986 = vmatprep.subr.mxu0 0.0
        %987 = vmatpush2.msra.mxu0 0.0
        %988 = vmatprep.subr.mxu0 0.0
        %989 = vmatpush2.msra.mxu0 0.0
        %990 = vmatprep.subr.mxu0 0.0
        %991 = vmatpush2.msra.mxu0 0.0
        %992 = vmatprep.subr.mxu0 0.0
        %993 = vmatpush2.msra.mxu0 0.0
        %994 = vmatprep.subr.mxu0 0.0
        %995 = vmatpush2.msra.mxu0 0.0
        %996 = vmatprep.subr.mxu0 0.0
        %997 = vmatpush2.msra.mxu0 0.0
        %998 = vmatprep.subr.mxu0 0.0
        %999 = vmatpush2.msra.mxu0 0.0
        %1000 = vmatprep.mubr.f32.mxu0 0.0
        %1001 = vmatmul.mubr.f32.gmra.mxu0 %v934
        %v1002 = vpop.f32.mrf.mxu0
        %v1003 = vadd.f32 %v785, %v1002
        %v1004 = vpop.f32.mrf.mxu0
        %1005 = vdwg.mxu0
        %v1007 = vsel %vm369, %v776, 0
        %1009 = vmatprep.subr.mxu0 0.0
        %1010 = vmatpush1.msra.mxu0 0.0
        %1011 = vmatprep.subr.mxu0 0.0
        %1012 = vmatpush1.msra.mxu0 0.0
        %1013 = vmatprep.subr.mxu0 0.0
        %1014 = vmatpush1.msra.mxu0 0.0
        %1015 = vmatprep.subr.mxu0 0.0
        %1016 = vmatpush1.msra.mxu0 0.0
        %1017 = vmatprep.subr.mxu0 0.0
        %1018 = vmatpush1.msra.mxu0 0.0
        %1019 = vmatprep.subr.mxu0 0.0
        %1020 = vmatpush1.msra.mxu0 0.0
        %1021 = vmatprep.subr.mxu0 0.0
        %1022 = vmatpush1.msra.mxu0 0.0
        %1023 = vmatprep.subr.mxu0 0.0
        %1024 = vmatpush1.msra.mxu0 0.0
        %1025 = vmatprep.subr.mxu0 0.0
        %1026 = vmatpush1.msra.mxu0 0.0
        %1027 = vmatprep.subr.mxu0 0.0
        %1028 = vmatpush1.msra.mxu0 0.0
        %1029 = vmatprep.subr.mxu0 0.0
        %1030 = vmatpush1.msra.mxu0 0.0
        %1031 = vmatprep.subr.mxu0 0.0
        %1032 = vmatpush1.msra.mxu0 0.0
        %1033 = vmatprep.subr.mxu0 0.0
        %1034 = vmatpush1.msra.mxu0 0.0
        %1035 = vmatprep.subr.mxu0 0.0
        %1036 = vmatpush1.msra.mxu0 0.0
        %1037 = vmatprep.subr.mxu0 0.0
        %1038 = vmatpush1.msra.mxu0 0.0
        %1039 = vmatprep.subr.mxu0 0.0
        %1040 = vmatpush1.msra.mxu0 %v779
        %1041 = vmatprep.subr.mxu0 0.0
        %1042 = vmatpush2.msra.mxu0 0.0
        %1043 = vmatprep.subr.mxu0 0.0
        %1044 = vmatpush2.msra.mxu0 0.0
        %1045 = vmatprep.subr.mxu0 0.0
        %1046 = vmatpush2.msra.mxu0 0.0
        %1047 = vmatprep.subr.mxu0 0.0
        %1048 = vmatpush2.msra.mxu0 0.0
        %1049 = vmatprep.subr.mxu0 0.0
        %1050 = vmatpush2.msra.mxu0 0.0
        %1051 = vmatprep.subr.mxu0 0.0
        %1052 = vmatpush2.msra.mxu0 0.0
        %1053 = vmatprep.subr.mxu0 0.0
        %1054 = vmatpush2.msra.mxu0 0.0
        %1055 = vmatprep.subr.mxu0 0.0
        %1056 = vmatpush2.msra.mxu0 0.0
        %1057 = vmatprep.subr.mxu0 0.0
        %1058 = vmatpush2.msra.mxu0 0.0
        %1059 = vmatprep.subr.mxu0 0.0
        %1060 = vmatpush2.msra.mxu0 0.0
        %1061 = vmatprep.subr.mxu0 0.0
        %1062 = vmatpush2.msra.mxu0 0.0
        %1063 = vmatprep.subr.mxu0 0.0
        %1064 = vmatpush2.msra.mxu0 0.0
        %1065 = vmatprep.subr.mxu0 0.0
        %1066 = vmatpush2.msra.mxu0 0.0
        %1067 = vmatprep.subr.mxu0 0.0
        %1068 = vmatpush2.msra.mxu0 0.0
        %1069 = vmatprep.subr.mxu0 0.0
        %1070 = vmatpush2.msra.mxu0 0.0
        %1071 = vmatprep.subr.mxu0 0.0
        %1072 = vmatpush2.msra.mxu0 0.0
        %1073 = vmatprep.mubr.f32.mxu0 0.0
        %1074 = vmatmul.mubr.f32.gmra.mxu0 %v1007
        %v1075 = vpop.f32.mrf.mxu0
        %v1076 = vadd.f32 %v785, %v1075
        %v1077 = vpop.f32.mrf.mxu0
        %1078 = vdwg.mxu0
        %1083 = vset.pattern.permute.xlu0 0
        %1084 = vperm.xlu0 %1083, %v857
        %v1085 = vpop.permute.xlu0 %1084
        %1086 = vset.pattern.permute.xlu0 0
        %1087 = vperm.xlu0 %1086, %v930
        %v1088 = vpop.permute.xlu0 %1087
        %1089 = vset.pattern.permute.xlu0 0
        %1090 = vperm.xlu0 %1089, %v1003
        %v1091 = vpop.permute.xlu0 %1090
        %1092 = vset.pattern.permute.xlu0 0
        %1093 = vperm.xlu0 %1092, %v1076
        %v1094 = vpop.permute.xlu0 %1093
        %v1095 = vlaneseq
        %v1096 = vand.u32 %v1095, 127
        %v1097 = vlaneseq
        %v1098 = vshrl.u32 %v1097, 7
        %v1099 = vsub.s32 %v1096, %v1098
        %v1100 = vrot.slane %v1085, %v1099
        %v1101 = vlaneseq
        %v1102 = vshrl.u32 %v1101, 7
        %v1103 = vsub.s32 %v1096, %v1102
        %v1104 = vrot.slane %v1088, %v1103
        %v1105 = vlaneseq
        %v1106 = vshrl.u32 %v1105, 7
        %v1107 = vsub.s32 %v1096, %v1106
        %v1108 = vrot.slane %v1091, %v1107
        %v1109 = vlaneseq
        %v1110 = vshrl.u32 %v1109, 7
        %v1111 = vsub.s32 %v1096, %v1110
        %v1112 = vrot.slane %v1094, %v1111
        %vm1113 = vcmask 1041409
        %v1114 = vsel %vm1113, %v1104, %v1100
        %vm1115 = vcmask 1042434
        %v1116 = vsel %vm1115, %v1108, %v1114
        %vm1117 = vcmask 1043459
        %v1118 = vsel %vm1117, %v1112, %v1116
        %vm1120 = vcmask 60416
        %1121 = vst.msk [vmem:[%s274] sm:$0xf] %vm1120, %v1118
        %s1122 = sand.u32 %s183, 1
        %s1123 = scalar_lea.sflag [#allocation4], %s1122
        %s1124 = sand.u32 %s183, 1
        %s1125 = smul.addr %s1124, 4
        %s1126 = scalar_lea.vmem [#allocation3], %s1125
        // Predicated region
        $region49: #{tpu_custom_call.1} parent=47 // pred_check
          %p1127 = pneg %p193
        $region50: #{tpu_custom_call.1} parent=47 // pred_check_branch
          %1129 = sbr.rel (%p1127) target = $region52
        $region51: #{tpu_custom_call.1} parent=47 // pred_region
          %s1131 = ssub.s32 64, 64
          %1132 = vsyncadd %s1123, %s1131
          %s1133 = smul.addr %s23, 64
          %s1134 = scalar_lea.hbm %s7, %s1133
          %s1136 = sshll.u32 %s1126, 4
          %s1137 = int_to_ptr.vmem [resolvable:$true] %s1136
          %1139 = dma.vmem_to_hbm [thread:$0]  %s1137, 64, %s1134, %s1123
        $region52: #{tpu_custom_call.1} parent=47 // pred_fallthru
          _
      $region48: #{tpu_custom_call.1} parent=5 // pred_fallthru
        _
      %p1140 = scmp.le.s32.totalorder 2, %s18
      // Predicated region
      $region53: #{tpu_custom_call.1} parent=5 // pred_check
        %p1141 = pneg %p1140
      $region54: #{tpu_custom_call.1} parent=5 // pred_check_branch
        %1143 = sbr.rel (%p1141) target = $region56
      $region55: #{tpu_custom_call.1} parent=5 // pred_region
        %s1144 = ssub.s32 %s18, 2
        // Predicated region
        $region57: #{tpu_custom_call.1} parent=55 // pred_check
          %p1145 = pneg %p199
        $region58: #{tpu_custom_call.1} parent=55 // pred_check_branch
          %1147 = sbr.rel (%p1145) target = $region60
        $region59: #{tpu_custom_call.1} parent=55 // pred_region
          %s1148 = sand.u32 %s184, 1
          %s1149 = scalar_lea.sflag [#allocation4], %s1148
          %s1150 = sand.u32 %s184, 1
          %s1151 = smul.addr %s1150, 4
          %s1152 = scalar_lea.vmem [#allocation3], %s1151
          %1153 = dma.done %s1149, 64
        $region60: #{tpu_custom_call.1} parent=55 // pred_fallthru
          _
      $region56: #{tpu_custom_call.1} parent=5 // pred_fallthru
        _
    $region6: #{tpu_custom_call.1} parent=1 // loop_footer
      %s22 = sadd.s32 1, %s18
    $region7: #{tpu_custom_call.1} parent=1 // loop_footer_branch
      %17 = sbr.rel target = $region3
    $region8: #{tpu_custom_call.1} parent=1 // loop_exit
      _
    %1154 = vsyncpa [#allocation4], 1
    %s1155 = scalar_lea.sflag [#allocation4], 1
    %1156 = vsyncpa %s1155, 1

</llo_original>
